<compile_context>
chip_gen: v5e
topology: v5e:2x2
jax: 0.10.0
libtpu: 0.0.40
codegen_flags: <defaults>
</compile_context>

<pallas_src>
import functools

import jax
import jax.numpy as jnp
from jax import lax
from jax.experimental import pallas as pl
from jax.experimental.pallas import tpu as pltpu

HIDDEN = 100
N_CLASSES = 2


def _round_up(n: int, m: int) -> int:
    return ((n + m - 1) // m) * m


def mlp_kernel(x_ref, w1t_ref, b1_ref, w2t_ref, b2_ref, o_ref, *, cast_bf16):
    x = x_ref[...]
    if cast_bf16:
        # In-kernel VPU cast: x is streamed from HBM once in f32 (no extra
        # wrapper-side pad/cast pass); MXU then runs native bf16 x bf16 -> f32.
        x = x.astype(jnp.bfloat16)

    # fc1, transposed: contract (HP, D) with (TILE_B, D) over D -> (HP, TILE_B).
    # A @ B^T form keeps the batch on the lane axis without transposing x in HBM.
    h = lax.dot_general(
        w1t_ref[...], x,
        dimension_numbers=(((1,), (1,)), ((), ())),
        preferred_element_type=jnp.float32,
    )
    h = jnp.maximum(h + b1_ref[...], 0.0)                     # bias + ReLU, f32 VPU

    # fc2, transposed: (2, HP) @ (HP, TILE_B) -> (2, TILE_B); lane-dense output.
    w2t = w2t_ref[...]
    h2 = h.astype(w2t.dtype) if cast_bf16 else h              # tiny matmul in bf16 too
    logits_t = jnp.dot(w2t, h2, preferred_element_type=jnp.float32) + b2_ref[...]

    # softmax over 2 classes == sigmoid(l1 - l0); removes cross-lane max/sum.
    diff = logits_t[1:2, :] - logits_t[0:1, :]                # (1, TILE_B)
    p1 = 1.0 / (1.0 + jnp.exp(-diff))                         # exact; EUP exp
    # single fused (2, TILE_B) store instead of two masked (1, TILE_B) stores
    o_ref[...] = jnp.concatenate([1.0 - p1, p1], axis=0).astype(o_ref.dtype)


def _choose_tile_b(B, D, HP, x_bytes, w_bytes, vmem_budget_bytes):
    """Pick a batch tile: ~1 MiB of x per tile, within the VMEM working-set budget."""
    bp128 = _round_up(max(B, 1), 128)
    # ~1 MiB of x per tile amortizes the ~0.35 us (~600 cycle) per-grid-step cost.
    tb = _round_up(max((1 << 20) // max(D * x_bytes, 1), 128), 128)
    # VMEM working set: resident weights (double-buffered by default) + per-step
    # x double-buffer, h intermediate (f32), and output double-buffer.
    resident = 2 * (HP * D * w_bytes + HP * 4 + N_CLASSES * HP * w_bytes + N_CLASSES * 4)
    per_row = 2 * D * x_bytes + HP * 4 + 2 * N_CLASSES * 4
    tb_max = (max(vmem_budget_bytes - resident, per_row * 128) // per_row) // 128 * 128
    tb = max(128, min(tb, tb_max, bp128))
    # Keep >= 2 grid steps when the batch allows it: v7x megacore sharding of the
    # "parallel" axis needs >= 2 tiles, and pipelining needs steps to overlap.
    if tb == bp128 and bp128 >= 256:
        tb = max(128, (bp128 // 2) // 128 * 128)
    return tb


@functools.partial(
    jax.jit, static_argnames=("tile_b", "use_bf16", "vmem_budget_bytes"))
def mlp_classifier_forward(x, w1, b1, w2, b2, *, tile_b=None, use_bf16=False,
                           vmem_budget_bytes=40 * 1024 * 1024):
    """x: (B, D) f32; w1: (D, 100); b1: (100,); w2: (100, 2); b2: (2,).

    Weights are stored as (in_features, out_features) (transpose of PyTorch's
    nn.Linear layout). Returns softmax probabilities of shape (B, 2).

    vmem_budget_bytes: working-set budget used to size the batch tile.  Default
    40 MiB is safe on v7x (64 MiB VMEM); raise to ~100 MiB on v5e/v6e (128 MiB).
    """
    B, D = x.shape
    H = w1.shape[1]
    assert w2.shape == (H, N_CLASSES)
    HP = _round_up(H, 128)                       # 100 -> 128 (exact zero padding)

    w_bytes = 2 if use_bf16 else 4
    w_dtype = jnp.bfloat16 if use_bf16 else jnp.float32

    # Parameters, padded + transposed for the batch-on-lane formulation (tiny;
    # x itself is never copied/cast in the wrapper).
    w1t = jnp.pad(w1, ((0, 0), (0, HP - H))).T.astype(w_dtype)          # (HP, D)
    b1c = jnp.pad(b1, (0, HP - H)).reshape(HP, 1).astype(jnp.float32)   # (HP, 1)
    w2t = jnp.pad(w2, ((0, HP - H), (0, 0))).T.astype(w_dtype)          # (2, HP)
    b2c = b2.reshape(N_CLASSES, 1).astype(jnp.float32)                  # (2, 1)

    # Batch tiling: multiples of 128 (lane-dense output blocks), tail padded.
    if tile_b is not None:
        tb = max(128, _round_up(min(tile_b, _round_up(B, 128)), 128))
    else:
        tb = _choose_tile_b(B, D, HP, 4, w_bytes, vmem_budget_bytes)
    Bp = _round_up(B, tb)
    xp = x.astype(jnp.float32)
    if Bp != B:                                  # skip the pad copy when not needed
        xp = jnp.pad(xp, ((0, Bp - B), (0, 0)))

    vmem_limit = min(max(48 * 1024 * 1024, vmem_budget_bytes + 8 * 1024 * 1024),
                     112 * 1024 * 1024)

    kernel = functools.partial(mlp_kernel, cast_bf16=use_bf16)

    out_t = pl.pallas_call(
        kernel,
        out_shape=jax.ShapeDtypeStruct((N_CLASSES, Bp), jnp.float32),
        grid_spec=pltpu.PrefetchScalarGridSpec(
            num_scalar_prefetch=0,
            grid=(Bp // tb,),
            in_specs=[
                pl.BlockSpec((tb, D), lambda i: (i, 0)),          # x batch tile
                pl.BlockSpec((HP, D), lambda i: (0, 0)),          # W1^T, resident
                pl.BlockSpec((HP, 1), lambda i: (0, 0)),          # b1,   resident
                pl.BlockSpec((N_CLASSES, HP), lambda i: (0, 0)),  # W2^T, resident
                pl.BlockSpec((N_CLASSES, 1), lambda i: (0, 0)),   # b2,   resident
            ],
            out_specs=pl.BlockSpec((N_CLASSES, tb), lambda i: (0, i)),
        ),
        compiler_params=pltpu.CompilerParams(
            dimension_semantics=("parallel",),   # shards batch tiles across TCs
            vmem_limit_bytes=vmem_limit,
        ),
    )(xp, w1t, b1c, w2t, b2c)

    return out_t.T[:B]                            # (B, 2)


def init_params(key, input_dim):
    """Mimics nn.Linear's uniform(-1/sqrt(fan_in), 1/sqrt(fan_in)) init."""
    k1, k2, k3, k4 = jax.random.split(key, 4)
    bound1 = 1.0 / jnp.sqrt(jnp.float32(input_dim))
    bound2 = 1.0 / jnp.sqrt(jnp.float32(HIDDEN))
    # stored as (in_features, out_features) == transpose of PyTorch's weight layout
    w1 = jax.random.uniform(k1, (input_dim, HIDDEN), jnp.float32, -bound1, bound1)
    b1 = jax.random.uniform(k2, (HIDDEN,), jnp.float32, -bound1, bound1)
    w2 = jax.random.uniform(k3, (HIDDEN, N_CLASSES), jnp.float32, -bound2, bound2)
    b2 = jax.random.uniform(k4, (N_CLASSES,), jnp.float32, -bound2, bound2)
    return w1, b1, w2, b2


# TODO(synk): fit()/predict()/CrossEntropyLoss training loop is host-side training
# logic, not part of the forward pass, and is intentionally not ported to Pallas.

if __name__ == "__main__":
    key = jax.random.PRNGKey(0)
    kx, kp = jax.random.split(key)

    batch, input_dim = 8, 32
    x = jax.random.normal(kx, (batch, input_dim), jnp.float32)
    w1, b1, w2, b2 = init_params(kp, input_dim)

    # default f32 path (exact; MXU accumulates in f32)
    probs = mlp_classifier_forward(x, w1, b1, w2, b2)
    probs = jax.block_until_ready(probs)

    # plain-JAX reference with the original module semantics (f32)
    h_ref = jnp.maximum(x @ w1 + b1, 0.0)
    logits_ref = h_ref @ w2 + b2
    probs_ref = jax.nn.softmax(logits_ref, axis=1)

    assert probs.shape == (batch, N_CLASSES)
    assert jnp.allclose(jnp.sum(probs, axis=1), 1.0, atol=1e-5)
    assert jnp.allclose(probs, probs_ref, atol=1e-4), "f32 path mismatch"

    # bf16 matmul-input path: MXU-native on TPU; only exercised on a TPU backend.
    if jax.default_backend() == "tpu":
        probs_bf16 = jax.block_until_ready(
            mlp_classifier_forward(x, w1, b1, w2, b2, use_bf16=True))
        assert probs_bf16.shape == (batch, N_CLASSES)
        assert jnp.allclose(jnp.sum(probs_bf16, axis=1), 1.0, atol=1e-5)
        assert jnp.allclose(probs_bf16, probs_ref, atol=2e-2), "bf16 path mismatch"

    print("KERNEL_OK")
</pallas_src>

<mosaic_0001>
module attributes {stable_mosaic.version = 11 : i64} {
  func.func @mlp_kernel(%arg0: i32, %arg1: memref<128x32xf32, #tpu.memory_space<vmem>>, %arg2: memref<128x32xf32, #tpu.memory_space<vmem>>, %arg3: memref<128x1xf32, #tpu.memory_space<vmem>>, %arg4: memref<2x128xf32, #tpu.memory_space<vmem>>, %arg5: memref<2x1xf32, #tpu.memory_space<vmem>>, %arg6: memref<2x128xf32, #tpu.memory_space<vmem>>) attributes {dimension_semantics = [#tpu.dimension_semantics<parallel>], iteration_bounds = array<i64: 1>, scalar_prefetch = 0 : i64, scratch_operands = 0 : i64, tpu.core_type = #tpu.core_type<tc>, window_params = [{transform_indices = @transform_0, window_bounds = array<i64: 128, 32>}, {pipeline_mode = #tpu.pipeline_mode<synchronous>, transform_indices = @transform_1, window_bounds = array<i64: 128, 32>}, {pipeline_mode = #tpu.pipeline_mode<synchronous>, transform_indices = @transform_2, window_bounds = array<i64: 128, 1>}, {pipeline_mode = #tpu.pipeline_mode<synchronous>, transform_indices = @transform_3, window_bounds = array<i64: 2, 128>}, {pipeline_mode = #tpu.pipeline_mode<synchronous>, transform_indices = @transform_4, window_bounds = array<i64: 2, 1>}, {transform_indices = @transform_5, window_bounds = array<i64: 2, 128>}]} {
    %c0 = arith.constant 0 : index
    %c0_0 = arith.constant 0 : index
    %0 = vector.load %arg1[%c0, %c0_0] : memref<128x32xf32, #tpu.memory_space<vmem>>, vector<128x32xf32>
    %c0_1 = arith.constant 0 : index
    %c0_2 = arith.constant 0 : index
    %1 = vector.load %arg2[%c0_1, %c0_2] : memref<128x32xf32, #tpu.memory_space<vmem>>, vector<128x32xf32>
    %cst = arith.constant dense<0.000000e+00> : vector<128x128xf32>
    %2 = tpu.matmul %1, %0, %cst {dimension_numbers = #tpu.dot_dimension_numbers<[1], [1], [0], [0], [0, 0, 1, 0], [], []>} : vector<128x32xf32>, vector<128x32xf32>, vector<128x128xf32> -> vector<128x128xf32>
    %c0_3 = arith.constant 0 : index
    %c0_4 = arith.constant 0 : index
    %3 = vector.load %arg3[%c0_3, %c0_4] : memref<128x1xf32, #tpu.memory_space<vmem>>, vector<128x1xf32>
    %4 = vector.broadcast %3 : vector<128x1xf32> to vector<128x128xf32>
    %5 = arith.addf %2, %4 : vector<128x128xf32>
    %cst_5 = arith.constant 0.000000e+00 : f32
    %6 = vector.broadcast %cst_5 : f32 to vector<128x128xf32>
    %7 = arith.maximumf %5, %6 : vector<128x128xf32>
    %c0_6 = arith.constant 0 : index
    %c0_7 = arith.constant 0 : index
    %8 = vector.load %arg4[%c0_6, %c0_7] : memref<2x128xf32, #tpu.memory_space<vmem>>, vector<2x128xf32>
    %cst_8 = arith.constant dense<0.000000e+00> : vector<2x128xf32>
    %9 = tpu.matmul %8, %7, %cst_8 {dimension_numbers = #tpu.dot_dimension_numbers<[1], [0], [0], [1], [0, 0, 1, 1], [], []>} : vector<2x128xf32>, vector<128x128xf32>, vector<2x128xf32> -> vector<2x128xf32>
    %c0_9 = arith.constant 0 : index
    %c0_10 = arith.constant 0 : index
    %10 = vector.load %arg5[%c0_9, %c0_10] : memref<2x1xf32, #tpu.memory_space<vmem>>, vector<2x1xf32>
    %11 = vector.broadcast %10 : vector<2x1xf32> to vector<2x128xf32>
    %12 = arith.addf %9, %11 : vector<2x128xf32>
    %13 = vector.extract_strided_slice %12 {offsets = [1, 0], sizes = [1, 128], strides = [1, 1]} : vector<2x128xf32> to vector<1x128xf32>
    %14 = vector.extract_strided_slice %12 {offsets = [0, 0], sizes = [1, 128], strides = [1, 1]} : vector<2x128xf32> to vector<1x128xf32>
    %15 = arith.subf %13, %14 : vector<1x128xf32>
    %cst_11 = arith.constant 0.000000e+00 : f32
    %16 = vector.broadcast %cst_11 : f32 to vector<1x128xf32>
    %17 = arith.subf %16, %15 : vector<1x128xf32>
    %18 = math.exp %17 : vector<1x128xf32>
    %cst_12 = arith.constant 1.000000e+00 : f32
    %19 = vector.broadcast %cst_12 : f32 to vector<1x128xf32>
    %20 = arith.addf %19, %18 : vector<1x128xf32>
    %cst_13 = arith.constant 1.000000e+00 : f32
    %21 = vector.broadcast %cst_13 : f32 to vector<1x128xf32>
    %22 = arith.divf %21, %20 : vector<1x128xf32>
    %cst_14 = arith.constant 1.000000e+00 : f32
    %23 = vector.broadcast %cst_14 : f32 to vector<1x128xf32>
    %24 = arith.subf %23, %22 : vector<1x128xf32>
    %25 = tpu.concatenate %24, %22 in 0 : vector<1x128xf32>, vector<1x128xf32> -> vector<2x128xf32>
    %c0_15 = arith.constant 0 : index
    %c0_16 = arith.constant 0 : index
    %26 = vector.load %arg6[%c0_15, %c0_16] : memref<2x128xf32, #tpu.memory_space<vmem>>, vector<2x128xf32>
    tpu.vector_store %arg6[%c0_15, %c0_16], %25 {strides = array<i32>} : memref<2x128xf32, #tpu.memory_space<vmem>>, vector<2x128xf32>,
    return
  }
  func.func @transform_0(%arg0: i32) -> (i32, i32) {
    %c0_i32 = arith.constant 0 : i32
    %c0_i32_0 = arith.constant 0 : i32
    return %arg0, %c0_i32 : i32, i32
  }
  func.func @transform_1(%arg0: i32) -> (i32, i32) {
    %c0_i32 = arith.constant 0 : i32
    %c0_i32_0 = arith.constant 0 : i32
    %c0_i32_1 = arith.constant 0 : i32
    return %c0_i32, %c0_i32_0 : i32, i32
  }
  func.func @transform_2(%arg0: i32) -> (i32, i32) {
    %c0_i32 = arith.constant 0 : i32
    %c0_i32_0 = arith.constant 0 : i32
    %c0_i32_1 = arith.constant 0 : i32
    return %c0_i32, %c0_i32_0 : i32, i32
  }
  func.func @transform_3(%arg0: i32) -> (i32, i32) {
    %c0_i32 = arith.constant 0 : i32
    %c0_i32_0 = arith.constant 0 : i32
    %c0_i32_1 = arith.constant 0 : i32
    return %c0_i32, %c0_i32_0 : i32, i32
  }
  func.func @transform_4(%arg0: i32) -> (i32, i32) {
    %c0_i32 = arith.constant 0 : i32
    %c0_i32_0 = arith.constant 0 : i32
    %c0_i32_1 = arith.constant 0 : i32
    return %c0_i32, %c0_i32_0 : i32, i32
  }
  func.func @transform_5(%arg0: i32) -> (i32, i32) {
    %c0_i32 = arith.constant 0 : i32
    %c0_i32_0 = arith.constant 0 : i32
    return %c0_i32, %arg0 : i32, i32
  }
}

</mosaic_0001>

<llo_original>
// kernel: mlp_classifier_forward.1
$region0: #{mlp_classifier_forward.1}
  #allocation0 [shape = 'u32[]', space=smem, size = 0x4, offset = 0x4, fixed_abs, tag = 'smem constant byte address 0x4 - core index']
  #allocation1 [shape = 'u32[72,128]{1,0:T(1,128)}', space=vmem, size = 0x9000, scoped, tag = 'internal scratch']
  %s0 = inlined_call_operand.vmem [shape: f32[128,32], index: 0, kind: input, shape index: {}]
  %s1 = inlined_call_operand.vmem [shape: f32[128,32], index: 1, kind: input, shape index: {}]
  %s2 = inlined_call_operand.vmem [shape: f32[128,1], index: 2, kind: input, shape index: {}]
  %s3 = inlined_call_operand.vmem [shape: f32[2,128], index: 3, kind: input, shape index: {}]
  %s4 = inlined_call_operand.vmem [shape: f32[2,1], index: 4, kind: input, shape index: {}]
  %s5 = inlined_call_operand.hbm [shape: f32[2,128], index: 5, kind: output, shape index: {}]
  %s6 = sld [smem:[#allocation0]]
  $region30: #{mlp_classifier_forward.1} parent=0
    _
  %s8 = ssub.s32 1, %s6
  %s9 = scalar_select 0, %s8, %s6
  $region1: #{mlp_classifier_forward.1} parent=0
    #allocation2 [shape = 'u8[1024]{0}', space=vmem, size = 0x400, scoped, tag = 'output window, operand 0, single buffered']
    #allocation3 [shape = 's32[1]{0}', space=sflag, size = 0x4, scoped, tag = 'scoped memory for mlp_classifier_forward.1']
    %10 = vsyncpa [#allocation3], 0
    // Predicated region
    $region2: #{mlp_classifier_forward.1} parent=1 // pred_check
      _
    $region3: #{mlp_classifier_forward.1} parent=1 // pred_check_branch
      %12 = sbr.rel (0) target = $region5
    $region4: #{mlp_classifier_forward.1} parent=1 // pred_region
      _
    $region5: #{mlp_classifier_forward.1} parent=1 // pred_fallthru
      _
    // Predicated region
    $region6: #{mlp_classifier_forward.1} parent=1 // pred_check
      _
    $region7: #{mlp_classifier_forward.1} parent=1 // pred_check_branch
      %14 = sbr.rel (0) target = $region9
    $region8: #{mlp_classifier_forward.1} parent=1 // pred_region
      _
    $region9: #{mlp_classifier_forward.1} parent=1 // pred_fallthru
      _
    // Predicated region
    $region10: #{mlp_classifier_forward.1} parent=1 // pred_check
      _
    $region11: #{mlp_classifier_forward.1} parent=1 // pred_check_branch
      %16 = sbr.rel (0) target = $region13
    $region12: #{mlp_classifier_forward.1} parent=1 // pred_region
      _
    $region13: #{mlp_classifier_forward.1} parent=1 // pred_fallthru
      _
    // Predicated region
    $region14: #{mlp_classifier_forward.1} parent=1 // pred_check
      _
    $region15: #{mlp_classifier_forward.1} parent=1 // pred_check_branch
      %18 = sbr.rel (0) target = $region17
    $region16: #{mlp_classifier_forward.1} parent=1 // pred_region
      _
    $region17: #{mlp_classifier_forward.1} parent=1 // pred_fallthru
      _
    // Predicated region
    $region18: #{mlp_classifier_forward.1} parent=1 // pred_check
      _
    $region19: #{mlp_classifier_forward.1} parent=1 // pred_check_branch
      %20 = sbr.rel (0) target = $region21
    $region20: #{mlp_classifier_forward.1} parent=1 // pred_region
      _
    $region21: #{mlp_classifier_forward.1} parent=1 // pred_fallthru
      _
    %v21 = vld [vmem:[%s0] sm:$0xff]
    %v22 = vld [vmem:[%s0 + $0x8] sm:$0xff]
    %v23 = vld [vmem:[%s0 + $0x10] sm:$0xff]
    %v24 = vld [vmem:[%s0 + $0x18] sm:$0xff]
    %v25 = vld [vmem:[%s0 + $0x20] sm:$0xff]
    %v26 = vld [vmem:[%s0 + $0x28] sm:$0xff]
    %v27 = vld [vmem:[%s0 + $0x30] sm:$0xff]
    %v28 = vld [vmem:[%s0 + $0x38] sm:$0xff]
    %v29 = vld [vmem:[%s0 + $0x40] sm:$0xff]
    %v30 = vld [vmem:[%s0 + $0x48] sm:$0xff]
    %v31 = vld [vmem:[%s0 + $0x50] sm:$0xff]
    %v32 = vld [vmem:[%s0 + $0x58] sm:$0xff]
    %v33 = vld [vmem:[%s0 + $0x60] sm:$0xff]
    %v34 = vld [vmem:[%s0 + $0x68] sm:$0xff]
    %v35 = vld [vmem:[%s0 + $0x70] sm:$0xff]
    %v36 = vld [vmem:[%s0 + $0x78] sm:$0xff]
    %v37 = vld [vmem:[%s1] sm:$0xff]
    %v38 = vld [vmem:[%s1 + $0x8] sm:$0xff]
    %v39 = vld [vmem:[%s1 + $0x10] sm:$0xff]
    %v40 = vld [vmem:[%s1 + $0x18] sm:$0xff]
    %v41 = vld [vmem:[%s1 + $0x20] sm:$0xff]
    %v42 = vld [vmem:[%s1 + $0x28] sm:$0xff]
    %v43 = vld [vmem:[%s1 + $0x30] sm:$0xff]
    %v44 = vld [vmem:[%s1 + $0x38] sm:$0xff]
    %v45 = vld [vmem:[%s1 + $0x40] sm:$0xff]
    %v46 = vld [vmem:[%s1 + $0x48] sm:$0xff]
    %v47 = vld [vmem:[%s1 + $0x50] sm:$0xff]
    %v48 = vld [vmem:[%s1 + $0x58] sm:$0xff]
    %v49 = vld [vmem:[%s1 + $0x60] sm:$0xff]
    %v50 = vld [vmem:[%s1 + $0x68] sm:$0xff]
    %v51 = vld [vmem:[%s1 + $0x70] sm:$0xff]
    %v52 = vld [vmem:[%s1 + $0x78] sm:$0xff]
    %v53 = vld [vmem:[%s2] sm:$0xff]
    %v54 = vld [vmem:[%s2 + $0x8] sm:$0xff]
    %v55 = vld [vmem:[%s2 + $0x10] sm:$0xff]
    %v56 = vld [vmem:[%s2 + $0x18] sm:$0xff]
    %v57 = vld [vmem:[%s2 + $0x20] sm:$0xff]
    %v58 = vld [vmem:[%s2 + $0x28] sm:$0xff]
    %v59 = vld [vmem:[%s2 + $0x30] sm:$0xff]
    %v60 = vld [vmem:[%s2 + $0x38] sm:$0xff]
    %v61 = vld [vmem:[%s2 + $0x40] sm:$0xff]
    %v62 = vld [vmem:[%s2 + $0x48] sm:$0xff]
    %v63 = vld [vmem:[%s2 + $0x50] sm:$0xff]
    %v64 = vld [vmem:[%s2 + $0x58] sm:$0xff]
    %v65 = vld [vmem:[%s2 + $0x60] sm:$0xff]
    %v66 = vld [vmem:[%s2 + $0x68] sm:$0xff]
    %v67 = vld [vmem:[%s2 + $0x70] sm:$0xff]
    %v68 = vld [vmem:[%s2 + $0x78] sm:$0xff]
    %70 = vset.pattern.permute.xlu0 0
    %71 = vperm.xlu0 %70, %v53
    %v72 = vpop.permute.xlu0 %71
    %75 = vset.pattern.permute.xlu0 0
    %76 = vperm.xlu0 %75, %v54
    %v77 = vpop.permute.xlu0 %76
    %80 = vset.pattern.permute.xlu0 0
    %81 = vperm.xlu0 %80, %v55
    %v82 = vpop.permute.xlu0 %81
    %85 = vset.pattern.permute.xlu0 0
    %86 = vperm.xlu0 %85, %v56
    %v87 = vpop.permute.xlu0 %86
    %90 = vset.pattern.permute.xlu0 0
    %91 = vperm.xlu0 %90, %v57
    %v92 = vpop.permute.xlu0 %91
    %95 = vset.pattern.permute.xlu0 0
    %96 = vperm.xlu0 %95, %v58
    %v97 = vpop.permute.xlu0 %96
    %100 = vset.pattern.permute.xlu0 0
    %101 = vperm.xlu0 %100, %v59
    %v102 = vpop.permute.xlu0 %101
    %105 = vset.pattern.permute.xlu0 0
    %106 = vperm.xlu0 %105, %v60
    %v107 = vpop.permute.xlu0 %106
    %110 = vset.pattern.permute.xlu0 0
    %111 = vperm.xlu0 %110, %v61
    %v112 = vpop.permute.xlu0 %111
    %115 = vset.pattern.permute.xlu0 0
    %116 = vperm.xlu0 %115, %v62
    %v117 = vpop.permute.xlu0 %116
    %120 = vset.pattern.permute.xlu0 0
    %121 = vperm.xlu0 %120, %v63
    %v122 = vpop.permute.xlu0 %121
    %125 = vset.pattern.permute.xlu0 0
    %126 = vperm.xlu0 %125, %v64
    %v127 = vpop.permute.xlu0 %126
    %130 = vset.pattern.permute.xlu0 0
    %131 = vperm.xlu0 %130, %v65
    %v132 = vpop.permute.xlu0 %131
    %135 = vset.pattern.permute.xlu0 0
    %136 = vperm.xlu0 %135, %v66
    %v137 = vpop.permute.xlu0 %136
    %140 = vset.pattern.permute.xlu0 0
    %141 = vperm.xlu0 %140, %v67
    %v142 = vpop.permute.xlu0 %141
    %145 = vset.pattern.permute.xlu0 0
    %146 = vperm.xlu0 %145, %v68
    %v147 = vpop.permute.xlu0 %146
    %vm149 = vcmask 261120
    %v151 = vsel %vm149, %v37, 0
    %v154 = vsel %vm149, %v38, 0
    %v157 = vsel %vm149, %v39, 0
    %v160 = vsel %vm149, %v40, 0
    %v163 = vsel %vm149, %v41, 0
    %v166 = vsel %vm149, %v42, 0
    %v169 = vsel %vm149, %v43, 0
    %v172 = vsel %vm149, %v44, 0
    %v175 = vsel %vm149, %v45, 0
    %v178 = vsel %vm149, %v46, 0
    %v181 = vsel %vm149, %v47, 0
    %v184 = vsel %vm149, %v48, 0
    %v187 = vsel %vm149, %v49, 0
    %v190 = vsel %vm149, %v50, 0
    %v193 = vsel %vm149, %v51, 0
    %v196 = vsel %vm149, %v52, 0
    %v199 = vsel %vm149, %v21, 0
    %v202 = vsel %vm149, %v22, 0
    %v205 = vsel %vm149, %v23, 0
    %v208 = vsel %vm149, %v24, 0
    %v211 = vsel %vm149, %v25, 0
    %v214 = vsel %vm149, %v26, 0
    %v217 = vsel %vm149, %v27, 0
    %v220 = vsel %vm149, %v28, 0
    %v223 = vsel %vm149, %v29, 0
    %v226 = vsel %vm149, %v30, 0
    %v229 = vsel %vm149, %v31, 0
    %v232 = vsel %vm149, %v32, 0
    %v235 = vsel %vm149, %v33, 0
    %v238 = vsel %vm149, %v34, 0
    %v241 = vsel %vm149, %v35, 0
    %v244 = vsel %vm149, %v36, 0
    %246 = vmatpush.xpose.msra.mxu0 %v244
    %247 = vmatpush.xpose.msra.mxu0 %v241
    %248 = vmatpush.xpose.msra.mxu0 %v238
    %249 = vmatpush.xpose.msra.mxu0 %v235
    %250 = vmatpush.xpose.msra.mxu0 %v232
    %251 = vmatpush.xpose.msra.mxu0 %v229
    %252 = vmatpush.xpose.msra.mxu0 %v226
    %253 = vmatpush.xpose.msra.mxu0 %v223
    %254 = vmatpush.xpose.msra.mxu0 %v220
    %255 = vmatpush.xpose.msra.mxu0 %v217
    %256 = vmatpush.xpose.msra.mxu0 %v214
    %257 = vmatpush.xpose.msra.mxu0 %v211
    %258 = vmatpush.xpose.msra.mxu0 %v208
    %259 = vmatpush.xpose.msra.mxu0 %v205
    %260 = vmatpush.xpose.msra.mxu0 %v202
    %261 = vmatpush.xpose.msra.mxu0 %v199
    %262 = vmatmul.f32.gmra.mxu0 %v151
    %v263 = vpop.f32.mrf.mxu0
    %v264 = vadd.f32 %v72, %v263
    %265 = vmatmul.f32.gmra.mxu0 %v154
    %v266 = vpop.f32.mrf.mxu0
    %v267 = vadd.f32 %v77, %v266
    %268 = vmatmul.f32.gmra.mxu0 %v157
    %v269 = vpop.f32.mrf.mxu0
    %v270 = vadd.f32 %v82, %v269
    %271 = vmatmul.f32.gmra.mxu0 %v160
    %v272 = vpop.f32.mrf.mxu0
    %v273 = vadd.f32 %v87, %v272
    %274 = vmatmul.f32.gmra.mxu0 %v163
    %v275 = vpop.f32.mrf.mxu0
    %v276 = vadd.f32 %v92, %v275
    %277 = vmatmul.f32.gmra.mxu0 %v166
    %v278 = vpop.f32.mrf.mxu0
    %v279 = vadd.f32 %v97, %v278
    %280 = vmatmul.f32.gmra.mxu0 %v169
    %v281 = vpop.f32.mrf.mxu0
    %v282 = vadd.f32 %v102, %v281
    %283 = vmatmul.f32.gmra.mxu0 %v172
    %v284 = vpop.f32.mrf.mxu0
    %v285 = vadd.f32 %v107, %v284
    %286 = vmatmul.f32.gmra.mxu0 %v175
    %v287 = vpop.f32.mrf.mxu0
    %v288 = vadd.f32 %v112, %v287
    %289 = vmatmul.f32.gmra.mxu0 %v178
    %v290 = vpop.f32.mrf.mxu0
    %v291 = vadd.f32 %v117, %v290
    %292 = vmatmul.f32.gmra.mxu0 %v181
    %v293 = vpop.f32.mrf.mxu0
    %v294 = vadd.f32 %v122, %v293
    %295 = vmatmul.f32.gmra.mxu0 %v184
    %v296 = vpop.f32.mrf.mxu0
    %v297 = vadd.f32 %v127, %v296
    %298 = vmatmul.f32.gmra.mxu0 %v187
    %v299 = vpop.f32.mrf.mxu0
    %v300 = vadd.f32 %v132, %v299
    %301 = vmatmul.f32.gmra.mxu0 %v190
    %v302 = vpop.f32.mrf.mxu0
    %v303 = vadd.f32 %v137, %v302
    %304 = vmatmul.f32.gmra.mxu0 %v193
    %v305 = vpop.f32.mrf.mxu0
    %v306 = vadd.f32 %v142, %v305
    %307 = vmatmul.f32.gmra.mxu0 %v196
    %v308 = vpop.f32.mrf.mxu0
    %v309 = vadd.f32 %v147, %v308
    %310 = vdwg.mxu0
    %v311 = vmax.f32 %v264, 0.0
    %v312 = vmax.f32 %v267, 0.0
    %v313 = vmax.f32 %v270, 0.0
    %v314 = vmax.f32 %v273, 0.0
    %v315 = vmax.f32 %v276, 0.0
    %v316 = vmax.f32 %v279, 0.0
    %v317 = vmax.f32 %v282, 0.0
    %v318 = vmax.f32 %v285, 0.0
    %v319 = vmax.f32 %v288, 0.0
    %v320 = vmax.f32 %v291, 0.0
    %v321 = vmax.f32 %v294, 0.0
    %v322 = vmax.f32 %v297, 0.0
    %v323 = vmax.f32 %v300, 0.0
    %v324 = vmax.f32 %v303, 0.0
    %v325 = vmax.f32 %v306, 0.0
    %v326 = vmax.f32 %v309, 0.0
    %v327 = vld [vmem:[%s3] sm:$0x3]
    %v328 = vld [vmem:[%s4] sm:$0x3]
    %330 = vset.pattern.permute.xlu0 0
    %331 = vperm.xlu0 %330, %v328
    %v332 = vpop.permute.xlu0 %331
    %334 = vmatpush.msra.mxu0 %v326
    %335 = vmatpush.msra.mxu0 %v325
    %336 = vmatpush.msra.mxu0 %v324
    %337 = vmatpush.msra.mxu0 %v323
    %338 = vmatpush.msra.mxu0 %v322
    %339 = vmatpush.msra.mxu0 %v321
    %340 = vmatpush.msra.mxu0 %v320
    %341 = vmatpush.msra.mxu0 %v319
    %342 = vmatpush.msra.mxu0 %v318
    %343 = vmatpush.msra.mxu0 %v317
    %344 = vmatpush.msra.mxu0 %v316
    %345 = vmatpush.msra.mxu0 %v315
    %346 = vmatpush.msra.mxu0 %v314
    %347 = vmatpush.msra.mxu0 %v313
    %348 = vmatpush.msra.mxu0 %v312
    %349 = vmatpush.msra.mxu0 %v311
    %350 = vmatmul.f32.gmra.mxu0 %v327
    %v351 = vpop.f32.mrf.mxu0
    %v352 = vadd.f32 %v332, %v351
    %353 = vdwg.mxu0
    %v355 = vrot.slane %v352, 7
    %v357 = vsub.f32 %v352, %v355
    %v358 = vsub.f32 0.0, %v357
    %v359 = vmul.f32 %v358, 1.442695
    %v360 = vpow.pop %v359
    %v361 = vadd.f32 %v360, 1.0
    %v362 = vrcp.pop %v361
    %v363 = vmul.f32 %v361, %v362
    %v364 = vsub.f32 1.0, %v363
    %v365 = vmul.f32 %v362, %v364
    %v366 = vadd.f32 %v362, %v365
    %vm367 = vweird.f32 %v361
    %vm368 = vweird.f32 %v362
    %vm369 = vmor %vm367, %vm368
    %v370 = vsel %vm369, %v362, %v366
    %v371 = vand.u32 2147483647, %v361
    %vm372 = vcmp.eq.f32.partialorder %v371, 8.507059e+37
    %v373 = vand.u32 %v361, 2147483648
    %v374 = vor.u32 1.1754944e-38, %v373
    %v375 = vsel %vm372, %v374, %v370
    %v376 = vmul.f32 1.0, %v375
    %v377 = vsub.f32 1.0, %v376
    %v379 = vrot.slane %v377, 1
    %vm381 = vcmask 1040384
    %v382 = vsel %vm381, %v379, %v376
    %383 = vst [vmem:[#allocation2] sm:$0x3] %v382
    // Predicated region
    $region22: #{mlp_classifier_forward.1} parent=1 // pred_check
      _
    $region23: #{mlp_classifier_forward.1} parent=1 // pred_check_branch
      %385 = sbr.rel (0) target = $region25
    $region24: #{mlp_classifier_forward.1} parent=1 // pred_region
      %387 = vsyncadd [#allocation3], 0
      %s389 = sshll.u32 [#allocation2], 4
      %s390 = int_to_ptr.vmem [resolvable:$true] %s389
      %s391 = sshll.u32 %s5, 4
      %s392 = int_to_ptr.hbm [resolvable:$true] %s391
      %394 = dma.vmem_to_hbm [thread:$0]  %s390, 32, %s392, [#allocation3]
    $region25: #{mlp_classifier_forward.1} parent=1 // pred_fallthru
      _
    // Predicated region
    $region26: #{mlp_classifier_forward.1} parent=1 // pred_check
      _
    $region27: #{mlp_classifier_forward.1} parent=1 // pred_check_branch
      %396 = sbr.rel (0) target = $region29
    $region28: #{mlp_classifier_forward.1} parent=1 // pred_region
      %398 = dma.done [#allocation3], 32
    $region29: #{mlp_classifier_forward.1} parent=1 // pred_fallthru
      _
    %399 = vsyncpa [#allocation3], 1

</llo_original>
